<compile_context>
chip_gen: v7x
topology: tpu7x:2x2x1
jax: 0.10.0
libtpu: 0.0.40
codegen_flags: <defaults>
</compile_context>

<pallas_src>
import functools

import jax
import jax.numpy as jnp
from jax.experimental import pallas as pl
from jax.experimental.pallas import tpu as pltpu


def _round_up(a: int, b: int) -> int:
    return ((a + b - 1) // b) * b


def _vae_kernel(x_ref, eps_ref, enc_ref, dec_ref, out_ref, *,
                D, H, d, ce2, ceh, cd2, cdh, benc, bdec, compute_dtype):
    f32 = jnp.float32
    cdt = compute_dtype
    TN = x_ref.shape[0]

    x = x_ref[...]                          # (TN, D), io/compute dtype
    eps = eps_ref[...].astype(f32)          # (TN, d), elementwise math in f32

    # ---- encoder slab: 128-aligned segments [we1 | we2 | fused heads],
    #      biases in the last row (benc) of each segment ----
    we1 = enc_ref[0:D, 0:H]
    be1 = enc_ref[benc:benc + 1, 0:H].astype(f32)
    we2 = enc_ref[0:H, ce2:ce2 + H]
    be2 = enc_ref[benc:benc + 1, ce2:ce2 + H].astype(f32)
    whe = enc_ref[0:H, ceh:ceh + 2 * d]                 # [mu_enc | log_var_enc * d]
    bhe = enc_ref[benc:benc + 1, ceh:ceh + 2 * d].astype(f32)

    # shared encoder trunk (identical to running self.enc twice in PyTorch)
    h = jnp.maximum(jnp.dot(x.astype(cdt), we1, preferred_element_type=f32) + be1, 0.0)
    h = jnp.maximum(jnp.dot(h.astype(cdt), we2, preferred_element_type=f32) + be2, 0.0)

    # fused encoder heads: [mu_z (d) | log_var_z replicated d times]
    heads_e = jnp.dot(h.astype(cdt), whe, preferred_element_type=f32) + bhe  # (TN, 2d)
    mu_z = heads_e[:, 0:d]
    log_var_rep = heads_e[:, d:2 * d]       # d identical copies -> pure elementwise reparam

    # reparametrization trick (epsilon supplied from the host for determinism)
    z = mu_z + jnp.exp(0.5 * log_var_rep) * eps         # (TN, d), f32

    # ---- decoder slab: 128-aligned segments [wd1 | wd2 | fused heads] ----
    wd1 = dec_ref[0:d, 0:H]
    bd1 = dec_ref[bdec:bdec + 1, 0:H].astype(f32)
    wd2 = dec_ref[0:H, cd2:cd2 + H]
    bd2 = dec_ref[bdec:bdec + 1, cd2:cd2 + H].astype(f32)
    whd = dec_ref[0:H, cdh:cdh + 2 * D]                 # [mu_dec | log_var_dec]
    bhd = dec_ref[bdec:bdec + 1, cdh:cdh + 2 * D].astype(f32)

    g = jnp.maximum(jnp.dot(z.astype(cdt), wd1, preferred_element_type=f32) + bd1, 0.0)
    g = jnp.maximum(jnp.dot(g.astype(cdt), wd2, preferred_element_type=f32) + bd2, 0.0)
    heads_d = jnp.dot(g.astype(cdt), whd, preferred_element_type=f32) + bhd  # (TN, 2D)

    # ---- single lane-dense store:
    #      [mu_x | log_var_x | z | mu_z | log_var_z*d | zero pad] in one DMA ----
    used = 2 * D + 3 * d
    pad = out_ref.shape[1] - used
    parts = [heads_d, z, heads_e]
    if pad:
        parts.append(jnp.zeros((TN, pad), f32))
    out_ref[...] = jnp.concatenate(parts, axis=1).astype(out_ref.dtype)


def pack_params(params, D, H, d, dtype):
    """Fuse the heads and pack all 16 parameter arrays into 2 lane-aligned slabs.

    Each weight segment starts at a 128-lane column boundary; its bias lives in
    the last row of the slab.  The log_var_enc column is replicated d times so
    the in-kernel reparametrization needs no cross-lane broadcast.
    """
    (we1, be1, we2, be2, wmue, bmue, wlve, blve,
     wd1, bd1, wd2, bd2, wmud, bmud, wlvd, blvd) = params

    whe = jnp.concatenate([wmue, jnp.tile(wlve, (1, d))], axis=1)   # (H, 2d)
    bhe = jnp.concatenate([bmue, jnp.tile(blve, (1, d))], axis=1)   # (1, 2d)
    whd = jnp.concatenate([wmud, wlvd], axis=1)                     # (H, 2D)
    bhd = jnp.concatenate([bmud, blvd], axis=1)                     # (1, 2D)

    def slab(wbs, rows):
        segs, offs, col = [], [], 0
        for W, b in wbs:
            w_cols = _round_up(W.shape[1], 128)          # 128-lane aligned segment
            seg = jnp.zeros((rows, w_cols), jnp.float32)
            seg = seg.at[:W.shape[0], :W.shape[1]].set(W)
            seg = seg.at[rows - 1, :W.shape[1]].set(b[0])
            segs.append(seg)
            offs.append(col)
            col += w_cols
        return jnp.concatenate(segs, axis=1).astype(dtype), offs

    rows_enc = _round_up(max(D, H) + 1, 16)   # multiple of 16: aligned for f32 & bf16
    rows_dec = _round_up(max(d, H) + 1, 16)
    enc_slab, enc_offs = slab([(we1, be1), (we2, be2), (whe, bhe)], rows_enc)
    dec_slab, dec_offs = slab([(wd1, bd1), (wd2, bd2), (whd, bhd)], rows_dec)
    return enc_slab, dec_slab, enc_offs, dec_offs, rows_enc - 1, rows_dec - 1


@functools.partial(jax.jit, static_argnames=("batch_tile", "dtype"))
def vae_forward(x, eps, params, *, batch_tile=1024, dtype=jnp.float32):
    """Full VAE forward pass in one Pallas kernel with a 1-D batch grid.

    dtype: kernel I/O & MXU-input dtype (f32 for validation; bf16 recommended
    on v6e/v7x -- accumulation is always f32).
    """
    N, D = x.shape
    d = eps.shape[1]
    H = params[0].shape[1]

    enc_slab, dec_slab, enc_offs, dec_offs, benc, bdec = \
        pack_params(params, D, H, d, dtype)

    OUT_W = 2 * D + 3 * d                       # [mu_x|log_var_x|z|mu_z|log_var_z*d]
    OUT_PAD = _round_up(OUT_W, 128)             # lane-dense output slab
    # NOTE: pad lanes [OUT_W:OUT_PAD] are written as zeros and never read.

    # batch tile: multiple of 8, big enough to amortize the ~0.35us per-step
    # overhead, but capped so the grid keeps >= 2 steps when the batch allows
    # it (v7x: 2 TensorCores share the "parallel" batch axis).
    TN = max(8, min(_round_up(batch_tile, 8), _round_up(N, 8)))
    if N > 8:
        TN = min(TN, _round_up(-(-N // 2), 8))
    Np = _round_up(N, TN)

    xd = x.astype(dtype)
    ed = eps.astype(dtype)
    if Np != N:
        xd = jnp.pad(xd, ((0, Np - N), (0, 0)))
        ed = jnp.pad(ed, ((0, Np - N), (0, 0)))

    # Scoped-VMEM estimate (double-buffered tiles + resident weight slabs);
    # only raise the limit when a huge batch tile would exceed v5e's 16 MiB default.
    isz = jnp.dtype(dtype).itemsize
    est_vmem = (2 * TN * (D + d) + 2 * TN * OUT_PAD) * isz \
        + enc_slab.size * isz + dec_slab.size * isz
    vmem_limit = None
    if est_vmem > 12 * 1024 * 1024:
        vmem_limit = min(int(2 * est_vmem), 60 * 1024 * 1024)

    kernel = functools.partial(
        _vae_kernel, D=D, H=H, d=d,
        ce2=enc_offs[1], ceh=enc_offs[2],
        cd2=dec_offs[1], cdh=dec_offs[2],
        benc=benc, bdec=bdec, compute_dtype=dtype)

    out = pl.pallas_call(
        kernel,
        out_shape=jax.ShapeDtypeStruct((Np, OUT_PAD), dtype),
        grid=(Np // TN,),
        in_specs=[
            pl.BlockSpec((TN, D), lambda i: (i, 0)),          # x tile (pipelined)
            pl.BlockSpec((TN, d), lambda i: (i, 0)),          # eps tile (pipelined)
            pl.BlockSpec(enc_slab.shape, lambda i: (0, 0)),   # weights: VMEM-resident
            pl.BlockSpec(dec_slab.shape, lambda i: (0, 0)),   # weights: VMEM-resident
        ],
        out_specs=pl.BlockSpec((TN, OUT_PAD), lambda i: (i, 0)),
        compiler_params=pltpu.CompilerParams(
            dimension_semantics=("parallel",),                # v7x: batch over 2 TCs
            vmem_limit_bytes=vmem_limit),
    )(xd, ed, enc_slab, dec_slab)

    out = out[:N]
    mu_x = out[:, 0:D]
    log_var_x = out[:, D:2 * D]
    z = out[:, 2 * D:2 * D + d]
    mu_z = out[:, 2 * D + d:2 * D + 2 * d]
    log_var_z = out[:, 2 * D + 2 * d:2 * D + 2 * d + 1]
    return mu_x, log_var_x, z, mu_z, log_var_z


def init_linear(key, fan_in, fan_out):
    """PyTorch-style uniform(-1/sqrt(fan_in), 1/sqrt(fan_in)) init (deterministic)."""
    kw, kb = jax.random.split(key)
    bound = 1.0 / jnp.sqrt(jnp.float32(fan_in))
    W = jax.random.uniform(kw, (fan_in, fan_out), jnp.float32, -bound, bound)
    b = jax.random.uniform(kb, (1, fan_out), jnp.float32, -bound, bound)
    return W, b


def init_params(key, d, D, H):
    keys = jax.random.split(key, 8)
    we1, be1 = init_linear(keys[0], D, H)    # enc layer 1
    we2, be2 = init_linear(keys[1], H, H)    # enc layer 2
    wmue, bmue = init_linear(keys[2], H, d)  # mu_enc head
    wlve, blve = init_linear(keys[3], H, 1)  # log_var_enc head (output dim 1)
    wd1, bd1 = init_linear(keys[4], d, H)    # dec layer 1
    wd2, bd2 = init_linear(keys[5], H, H)    # dec layer 2
    wmud, bmud = init_linear(keys[6], H, D)  # mu_dec head
    wlvd, blvd = init_linear(keys[7], H, D)  # log_var_dec head
    return (we1, be1, we2, be2, wmue, bmue, wlve, blve,
            wd1, bd1, wd2, bd2, wmud, bmud, wlvd, blvd)


def reference_forward(x, eps, params):
    """Pure-JAX reference mirroring the PyTorch module (ReLU as activFun)."""
    (we1, be1, we2, be2, wmue, bmue, wlve, blve,
     wd1, bd1, wd2, bd2, wmud, bmud, wlvd, blvd) = params
    relu = lambda t: jnp.maximum(t, 0.0)
    h = relu(x @ we1 + be1)
    h = relu(h @ we2 + be2)
    mu_z = h @ wmue + bmue
    log_var_z = h @ wlve + blve
    z = mu_z + jnp.exp(0.5 * log_var_z) * eps
    g = relu(z @ wd1 + bd1)
    g = relu(g @ wd2 + bd2)
    mu_x = g @ wmud + bmud
    log_var_x = g @ wlvd + blvd
    return mu_x, log_var_x, z, mu_z, log_var_z


if __name__ == "__main__":
    # small shapes consistent with the module: batch N, input dim D, hidden H, latent d
    N, D, H, d = 40, 32, 32, 8

    key = jax.random.PRNGKey(0)
    k_params, k_x, k_eps = jax.random.split(key, 3)

    params = init_params(k_params, d, D, H)
    x = jax.random.normal(k_x, (N, D), jnp.float32)
    # epsilon of reparametrization_trick, drawn on the host for determinism
    # (torch.randn_like has no deterministic in-kernel equivalent we need here)
    eps = jax.random.normal(k_eps, (N, d), jnp.float32)

    refs = reference_forward(x, eps, params)

    # f32 path: strict correctness check against the pure-JAX reference
    outs = jax.block_until_ready(vae_forward(x, eps, params, dtype=jnp.float32))
    for o, r in zip(outs, refs):
        assert o.shape == r.shape and o.dtype == r.dtype
        assert jnp.allclose(o, r, atol=1e-5, rtol=1e-5), "f32 mismatch vs reference"

    # bf16 I/O path (recommended on v6e/v7x): halves HBM traffic; looser
    # tolerance reflects expected bf16 precision loss, not a bug.
    outs_bf16 = jax.block_until_ready(vae_forward(x, eps, params, dtype=jnp.bfloat16))
    for o, r in zip(outs_bf16, refs):
        assert o.shape == r.shape
        assert jnp.allclose(o.astype(jnp.float32), r, atol=1e-1, rtol=1e-1), \
            "bf16 mismatch vs reference (beyond expected precision loss)"

    print("KERNEL_OK")
</pallas_src>

<mosaic_0001>
module attributes {stable_mosaic.version = 11 : i64} {
  func.func @_vae_kernel(%arg0: i32, %arg1: memref<24x32xf32, #tpu.memory_space<vmem>>, %arg2: memref<24x8xf32, #tpu.memory_space<vmem>>, %arg3: memref<48x384xf32, #tpu.memory_space<vmem>>, %arg4: memref<48x384xf32, #tpu.memory_space<vmem>>, %arg5: memref<24x128xf32, #tpu.memory_space<vmem>>) attributes {dimension_semantics = [#tpu.dimension_semantics<parallel>], iteration_bounds = array<i64: 2>, scalar_prefetch = 0 : i64, scratch_operands = 0 : i64, tpu.core_type = #tpu.core_type<tc>, window_params = [{transform_indices = @transform_0, window_bounds = array<i64: 24, 32>}, {transform_indices = @transform_1, window_bounds = array<i64: 24, 8>}, {pipeline_mode = #tpu.pipeline_mode<synchronous>, transform_indices = @transform_2, window_bounds = array<i64: 48, 384>}, {pipeline_mode = #tpu.pipeline_mode<synchronous>, transform_indices = @transform_3, window_bounds = array<i64: 48, 384>}, {transform_indices = @transform_4, window_bounds = array<i64: 24, 128>}]} {
    %c0 = arith.constant 0 : index
    %c0_0 = arith.constant 0 : index
    %0 = vector.load %arg1[%c0, %c0_0] : memref<24x32xf32, #tpu.memory_space<vmem>>, vector<24x32xf32>
    %c0_1 = arith.constant 0 : index
    %c0_2 = arith.constant 0 : index
    %1 = vector.load %arg2[%c0_1, %c0_2] : memref<24x8xf32, #tpu.memory_space<vmem>>, vector<24x8xf32>
    %c0_3 = arith.constant 0 : index
    %c0_4 = arith.constant 0 : index
    %2 = vector.load %arg3[%c0_3, %c0_4] : memref<48x384xf32, #tpu.memory_space<vmem>>, vector<32x32xf32>
    %c47 = arith.constant 47 : index
    %c0_5 = arith.constant 0 : index
    %3 = vector.load %arg3[%c47, %c0_5] : memref<48x384xf32, #tpu.memory_space<vmem>>, vector<1x32xf32>
    %c0_6 = arith.constant 0 : index
    %c128 = arith.constant 128 : index
    %4 = vector.load %arg3[%c0_6, %c128] : memref<48x384xf32, #tpu.memory_space<vmem>>, vector<32x32xf32>
    %c47_7 = arith.constant 47 : index
    %c128_8 = arith.constant 128 : index
    %5 = vector.load %arg3[%c47_7, %c128_8] : memref<48x384xf32, #tpu.memory_space<vmem>>, vector<1x32xf32>
    %c0_9 = arith.constant 0 : index
    %c256 = arith.constant 256 : index
    %6 = vector.load %arg3[%c0_9, %c256] : memref<48x384xf32, #tpu.memory_space<vmem>>, vector<32x16xf32>
    %c47_10 = arith.constant 47 : index
    %c256_11 = arith.constant 256 : index
    %7 = vector.load %arg3[%c47_10, %c256_11] : memref<48x384xf32, #tpu.memory_space<vmem>>, vector<1x16xf32>
    %cst = arith.constant dense<0.000000e+00> : vector<24x32xf32>
    %8 = tpu.matmul %0, %2, %cst {dimension_numbers = #tpu.dot_dimension_numbers<[1], [0], [0], [1], [0, 0, 1, 1], [], []>} : vector<24x32xf32>, vector<32x32xf32>, vector<24x32xf32> -> vector<24x32xf32>
    %9 = vector.broadcast %3 : vector<1x32xf32> to vector<24x32xf32>
    %10 = arith.addf %8, %9 : vector<24x32xf32>
    %cst_12 = arith.constant 0.000000e+00 : f32
    %11 = vector.broadcast %cst_12 : f32 to vector<24x32xf32>
    %12 = arith.maximumf %10, %11 : vector<24x32xf32>
    %cst_13 = arith.constant dense<0.000000e+00> : vector<24x32xf32>
    %13 = tpu.matmul %12, %4, %cst_13 {dimension_numbers = #tpu.dot_dimension_numbers<[1], [0], [0], [1], [0, 0, 1, 1], [], []>} : vector<24x32xf32>, vector<32x32xf32>, vector<24x32xf32> -> vector<24x32xf32>
    %14 = vector.broadcast %5 : vector<1x32xf32> to vector<24x32xf32>
    %15 = arith.addf %13, %14 : vector<24x32xf32>
    %cst_14 = arith.constant 0.000000e+00 : f32
    %16 = vector.broadcast %cst_14 : f32 to vector<24x32xf32>
    %17 = arith.maximumf %15, %16 : vector<24x32xf32>
    %cst_15 = arith.constant dense<0.000000e+00> : vector<24x16xf32>
    %18 = tpu.matmul %17, %6, %cst_15 {dimension_numbers = #tpu.dot_dimension_numbers<[1], [0], [0], [1], [0, 0, 1, 1], [], []>} : vector<24x32xf32>, vector<32x16xf32>, vector<24x16xf32> -> vector<24x16xf32>
    %19 = vector.broadcast %7 : vector<1x16xf32> to vector<24x16xf32>
    %20 = arith.addf %18, %19 : vector<24x16xf32>
    %21 = vector.extract_strided_slice %20 {offsets = [0, 0], sizes = [24, 8], strides = [1, 1]} : vector<24x16xf32> to vector<24x8xf32>
    %22 = vector.extract_strided_slice %20 {offsets = [0, 8], sizes = [24, 8], strides = [1, 1]} : vector<24x16xf32> to vector<24x8xf32>
    %cst_16 = arith.constant 5.000000e-01 : f32
    %23 = vector.broadcast %cst_16 : f32 to vector<24x8xf32>
    %24 = arith.mulf %23, %22 : vector<24x8xf32>
    %25 = math.exp %24 : vector<24x8xf32>
    %26 = arith.mulf %25, %1 : vector<24x8xf32>
    %27 = arith.addf %21, %26 : vector<24x8xf32>
    %c0_17 = arith.constant 0 : index
    %c0_18 = arith.constant 0 : index
    %28 = vector.load %arg4[%c0_17, %c0_18] : memref<48x384xf32, #tpu.memory_space<vmem>>, vector<8x32xf32>
    %c47_19 = arith.constant 47 : index
    %c0_20 = arith.constant 0 : index
    %29 = vector.load %arg4[%c47_19, %c0_20] : memref<48x384xf32, #tpu.memory_space<vmem>>, vector<1x32xf32>
    %c0_21 = arith.constant 0 : index
    %c128_22 = arith.constant 128 : index
    %30 = vector.load %arg4[%c0_21, %c128_22] : memref<48x384xf32, #tpu.memory_space<vmem>>, vector<32x32xf32>
    %c47_23 = arith.constant 47 : index
    %c128_24 = arith.constant 128 : index
    %31 = vector.load %arg4[%c47_23, %c128_24] : memref<48x384xf32, #tpu.memory_space<vmem>>, vector<1x32xf32>
    %c0_25 = arith.constant 0 : index
    %c256_26 = arith.constant 256 : index
    %32 = vector.load %arg4[%c0_25, %c256_26] : memref<48x384xf32, #tpu.memory_space<vmem>>, vector<32x64xf32>
    %c47_27 = arith.constant 47 : index
    %c256_28 = arith.constant 256 : index
    %33 = vector.load %arg4[%c47_27, %c256_28] : memref<48x384xf32, #tpu.memory_space<vmem>>, vector<1x64xf32>
    %cst_29 = arith.constant dense<0.000000e+00> : vector<24x32xf32>
    %34 = tpu.matmul %27, %28, %cst_29 {dimension_numbers = #tpu.dot_dimension_numbers<[1], [0], [0], [1], [0, 0, 1, 1], [], []>} : vector<24x8xf32>, vector<8x32xf32>, vector<24x32xf32> -> vector<24x32xf32>
    %35 = vector.broadcast %29 : vector<1x32xf32> to vector<24x32xf32>
    %36 = arith.addf %34, %35 : vector<24x32xf32>
    %cst_30 = arith.constant 0.000000e+00 : f32
    %37 = vector.broadcast %cst_30 : f32 to vector<24x32xf32>
    %38 = arith.maximumf %36, %37 : vector<24x32xf32>
    %cst_31 = arith.constant dense<0.000000e+00> : vector<24x32xf32>
    %39 = tpu.matmul %38, %30, %cst_31 {dimension_numbers = #tpu.dot_dimension_numbers<[1], [0], [0], [1], [0, 0, 1, 1], [], []>} : vector<24x32xf32>, vector<32x32xf32>, vector<24x32xf32> -> vector<24x32xf32>
    %40 = vector.broadcast %31 : vector<1x32xf32> to vector<24x32xf32>
    %41 = arith.addf %39, %40 : vector<24x32xf32>
    %cst_32 = arith.constant 0.000000e+00 : f32
    %42 = vector.broadcast %cst_32 : f32 to vector<24x32xf32>
    %43 = arith.maximumf %41, %42 : vector<24x32xf32>
    %cst_33 = arith.constant dense<0.000000e+00> : vector<24x64xf32>
    %44 = tpu.matmul %43, %32, %cst_33 {dimension_numbers = #tpu.dot_dimension_numbers<[1], [0], [0], [1], [0, 0, 1, 1], [], []>} : vector<24x32xf32>, vector<32x64xf32>, vector<24x64xf32> -> vector<24x64xf32>
    %45 = vector.broadcast %33 : vector<1x64xf32> to vector<24x64xf32>
    %46 = arith.addf %44, %45 : vector<24x64xf32>
    %cst_34 = arith.constant 0.000000e+00 : f32
    %47 = vector.broadcast %cst_34 : f32 to vector<24x40xf32>
    %48 = tpu.concatenate %46, %27, %20, %47 in 1 : vector<24x64xf32>, vector<24x8xf32>, vector<24x16xf32>, vector<24x40xf32> -> vector<24x128xf32>
    %c0_35 = arith.constant 0 : index
    %c0_36 = arith.constant 0 : index
    %49 = vector.load %arg5[%c0_35, %c0_36] : memref<24x128xf32, #tpu.memory_space<vmem>>, vector<24x128xf32>
    tpu.vector_store %arg5[%c0_35, %c0_36], %48 {strides = array<i32>} : memref<24x128xf32, #tpu.memory_space<vmem>>, vector<24x128xf32>,
    return
  }
  func.func @transform_0(%arg0: i32) -> (i32, i32) {
    %c0_i32 = arith.constant 0 : i32
    %c0_i32_0 = arith.constant 0 : i32
    return %arg0, %c0_i32 : i32, i32
  }
  func.func @transform_1(%arg0: i32) -> (i32, i32) {
    %c0_i32 = arith.constant 0 : i32
    %c0_i32_0 = arith.constant 0 : i32
    return %arg0, %c0_i32 : i32, i32
  }
  func.func @transform_2(%arg0: i32) -> (i32, i32) {
    %c0_i32 = arith.constant 0 : i32
    %c0_i32_0 = arith.constant 0 : i32
    %c0_i32_1 = arith.constant 0 : i32
    return %c0_i32, %c0_i32_0 : i32, i32
  }
  func.func @transform_3(%arg0: i32) -> (i32, i32) {
    %c0_i32 = arith.constant 0 : i32
    %c0_i32_0 = arith.constant 0 : i32
    %c0_i32_1 = arith.constant 0 : i32
    return %c0_i32, %c0_i32_0 : i32, i32
  }
  func.func @transform_4(%arg0: i32) -> (i32, i32) {
    %c0_i32 = arith.constant 0 : i32
    %c0_i32_0 = arith.constant 0 : i32
    return %arg0, %c0_i32 : i32, i32
  }
}

</mosaic_0001>

<llo_original>
// kernel: vae_forward.1
$region0: #{vae_forward.1}
  #allocation0 [shape = 'u32[]', space=smem, size = 0x4, offset = 0x4, fixed_abs, tag = 'smem constant byte address 0x4 - core index']
  #allocation1 [shape = 'u32[144,128]{1,0:T(1,128)}', space=vmem, size = 0x12000, scoped, tag = 'internal scratch']
  %s0 = inlined_call_operand.vmem [shape: f32[48,32], index: 0, kind: input, shape index: {}]
  %s1 = inlined_call_operand.vmem [shape: f32[48,8], index: 1, kind: input, shape index: {}]
  %s2 = inlined_call_operand.vmem [shape: f32[48,384], index: 2, kind: input, shape index: {}]
  %s3 = inlined_call_operand.vmem [shape: f32[48,384], index: 3, kind: input, shape index: {}]
  %s4 = inlined_call_operand.vmem [shape: f32[48,128], index: 4, kind: output, shape index: {}]
  %s5 = sld [smem:[#allocation0]]
  $region49: #{vae_forward.1} parent=0
    _
  %s7 = ssub.s32 1, %s5
  %s8 = scalar_select 0, %s7, %s5
  loop: start=0, step=1, limit=4
  $region2: #{vae_forward.1} parent=0 // loop_pre_header
    _
  $region3: #{vae_forward.1} parent=0 // loop_header
    %s10 = sphi 0, %s14
    %p11 = scmp.ge.s32.totalorder %s10, 4
    %s20 = sphi 0, %s22
    %s23 = sphi 0, %s20
    %s24 = sphi 0, %s23
    %s40 = sphi 0, %s24
    %s46 = sphi 0, %s48
    %s49 = sphi 0, %s46
    %s50 = sphi 0, %s49
    %s66 = sphi 0, %s50
    %s70 = sphi 0, %s70
    %s72 = sphi 0, %s70
    %s73 = sphi 0, %s72
    %s87 = sphi 0, %s73
    %s91 = sphi 0, %s91
    %s93 = sphi 0, %s91
    %s94 = sphi 0, %s93
    %s108 = sphi 0, %s94
    %s114 = sphi 0, %s116
    %s117 = sphi 0, %s114
    %s118 = sphi 0, %s117
    %s134 = sphi 0, %s118
  $region4: #{vae_forward.1} parent=0 // loop_header_branch
    %13 = sbr.rel (%p11) target = $region8
  $region5: #{vae_forward.1} parent=0 // loop_body
    %s15 = ssub.s32 %s10, 1
    %s16 = ssub.s32 %s10, 2
    %s17 = sadd.s32 %s10, 1
    %s18 = ssub.s32 %s10, %s17
    %p19 = scmp.eq.s32.totalorder %s18, 0
    %s21 = sadd.s32 %s20, 1
    %s22 = scalar_select %p19, %s20, %s21
    %p25 = pneg %p19
    %p26 = scmp.eq.s32.totalorder %s10, 1
    %p27 = por %p25, %p26
    %p28 = scmp.ne.s32.totalorder %s20, %s23
    %p29 = scmp.eq.s32.totalorder %s10, 0
    %p30 = por %p28, %p29
    %p31 = scmp.ne.s32.totalorder %s20, %s23
    %p32 = scmp.eq.s32.totalorder %s15, 1
    %p33 = por %p31, %p32
    %p34 = scmp.ne.s32.totalorder %s23, %s24
    %p35 = scmp.eq.s32.totalorder %s15, 0
    %p36 = por %p34, %p35
    %p37 = scmp.ne.s32.totalorder %s23, %s24
    %p38 = scmp.eq.s32.totalorder %s16, 1
    %p39 = por %p37, %p38
    %p41 = scmp.ne.s32.totalorder %s24, %s40
    %p42 = scmp.eq.s32.totalorder %s16, 0
    %p43 = por %p41, %p42
    %s44 = ssub.s32 %s10, %s17
    %p45 = scmp.eq.s32.totalorder %s44, 0
    %s47 = sadd.s32 %s46, 1
    %s48 = scalar_select %p45, %s46, %s47
    %p51 = pneg %p45
    %p52 = scmp.eq.s32.totalorder %s10, 1
    %p53 = por %p51, %p52
    %p54 = scmp.ne.s32.totalorder %s46, %s49
    %p55 = scmp.eq.s32.totalorder %s10, 0
    %p56 = por %p54, %p55
    %p57 = scmp.ne.s32.totalorder %s46, %s49
    %p58 = scmp.eq.s32.totalorder %s15, 1
    %p59 = por %p57, %p58
    %p60 = scmp.ne.s32.totalorder %s49, %s50
    %p61 = scmp.eq.s32.totalorder %s15, 0
    %p62 = por %p60, %p61
    %p63 = scmp.ne.s32.totalorder %s49, %s50
    %p64 = scmp.eq.s32.totalorder %s16, 1
    %p65 = por %p63, %p64
    %p67 = scmp.ne.s32.totalorder %s50, %s66
    %p68 = scmp.eq.s32.totalorder %s16, 0
    %p69 = por %p67, %p68
    %s71 = sadd.s32 %s70, 1
    %p74 = scmp.eq.s32.totalorder %s10, 1
    %p75 = scmp.ne.s32.totalorder %s70, %s72
    %p76 = scmp.eq.s32.totalorder %s10, 0
    %p77 = por %p75, %p76
    %p78 = scmp.ne.s32.totalorder %s70, %s72
    %p79 = scmp.eq.s32.totalorder %s15, 1
    %p80 = por %p78, %p79
    %p81 = scmp.ne.s32.totalorder %s72, %s73
    %p82 = scmp.eq.s32.totalorder %s15, 0
    %p83 = por %p81, %p82
    %p84 = scmp.ne.s32.totalorder %s72, %s73
    %p85 = scmp.eq.s32.totalorder %s16, 1
    %p86 = por %p84, %p85
    %p88 = scmp.ne.s32.totalorder %s73, %s87
    %p89 = scmp.eq.s32.totalorder %s16, 0
    %p90 = por %p88, %p89
    %s92 = sadd.s32 %s91, 1
    %p95 = scmp.eq.s32.totalorder %s10, 1
    %p96 = scmp.ne.s32.totalorder %s91, %s93
    %p97 = scmp.eq.s32.totalorder %s10, 0
    %p98 = por %p96, %p97
    %p99 = scmp.ne.s32.totalorder %s91, %s93
    %p100 = scmp.eq.s32.totalorder %s15, 1
    %p101 = por %p99, %p100
    %p102 = scmp.ne.s32.totalorder %s93, %s94
    %p103 = scmp.eq.s32.totalorder %s15, 0
    %p104 = por %p102, %p103
    %p105 = scmp.ne.s32.totalorder %s93, %s94
    %p106 = scmp.eq.s32.totalorder %s16, 1
    %p107 = por %p105, %p106
    %p109 = scmp.ne.s32.totalorder %s94, %s108
    %p110 = scmp.eq.s32.totalorder %s16, 0
    %p111 = por %p109, %p110
    %s112 = ssub.s32 %s10, %s17
    %p113 = scmp.eq.s32.totalorder %s112, 0
    %s115 = sadd.s32 %s114, 1
    %s116 = scalar_select %p113, %s114, %s115
    %p119 = pneg %p113
    %p120 = scmp.eq.s32.totalorder %s10, 1
    %p121 = por %p119, %p120
    %p122 = scmp.ne.s32.totalorder %s114, %s117
    %p123 = scmp.eq.s32.totalorder %s10, 0
    %p124 = por %p122, %p123
    %p125 = scmp.ne.s32.totalorder %s114, %s117
    %p126 = scmp.eq.s32.totalorder %s15, 1
    %p127 = por %p125, %p126
    %p128 = scmp.ne.s32.totalorder %s117, %s118
    %p129 = scmp.eq.s32.totalorder %s15, 0
    %p130 = por %p128, %p129
    %p131 = scmp.ne.s32.totalorder %s117, %s118
    %p132 = scmp.eq.s32.totalorder %s16, 1
    %p133 = por %p131, %p132
    %p135 = scmp.ne.s32.totalorder %s118, %s134
    %p136 = scmp.eq.s32.totalorder %s16, 0
    %p137 = por %p135, %p136
    %p138 = scmp.le.s32.totalorder 1, %s10
    %p139 = scmp.lt.s32.totalorder %s10, 3
    %p140 = pnand %p138, %p139
    %p141 = pneg %p140
    // Predicated region
    $region9: #{vae_forward.1} parent=5 // pred_check
      _
    $region10: #{vae_forward.1} parent=5 // pred_check_branch
      %143 = sbr.rel (%p140) target = $region12
    $region11: #{vae_forward.1} parent=5 // pred_region
      %s144 = ssub.s32 %s10, 1
      // Predicated region
      $region13: #{vae_forward.1} parent=11 // pred_check
        %p145 = pneg %p83
      $region14: #{vae_forward.1} parent=11 // pred_check_branch
        %147 = sbr.rel (%p145) target = $region16
      $region15: #{vae_forward.1} parent=11 // pred_region
        _
      $region16: #{vae_forward.1} parent=11 // pred_fallthru
        _
      // Predicated region
      $region17: #{vae_forward.1} parent=11 // pred_check
        %p148 = pneg %p104
      $region18: #{vae_forward.1} parent=11 // pred_check_branch
        %150 = sbr.rel (%p148) target = $region20
      $region19: #{vae_forward.1} parent=11 // pred_region
        _
      $region20: #{vae_forward.1} parent=11 // pred_fallthru
        _
    $region12: #{vae_forward.1} parent=5 // pred_fallthru
      _
    %p151 = scmp.lt.s32.totalorder %s10, 2
    // Predicated region
    $region21: #{vae_forward.1} parent=5 // pred_check
      %p152 = pneg %p151
    $region22: #{vae_forward.1} parent=5 // pred_check_branch
      %154 = sbr.rel (%p152) target = $region24
    $region23: #{vae_forward.1} parent=5 // pred_region
      // Predicated region
      $region25: #{vae_forward.1} parent=23 // pred_check
        %p155 = pneg %p30
      $region26: #{vae_forward.1} parent=23 // pred_check_branch
        %157 = sbr.rel (%p155) target = $region28
      $region27: #{vae_forward.1} parent=23 // pred_region
        %s158 = smul.u32 3, %s10
        %p159 = scmp.lt.s32.totalorder %s158, 5
        %s160 = scalar_select %p159, %s158, 5
        %s161 = smul.addr %s160, 8
        %s162 = scalar_lea.vmem %s0, %s161
        %s163 = smul.u32 3, %s10
      $region28: #{vae_forward.1} parent=23 // pred_fallthru
        _
      // Predicated region
      $region29: #{vae_forward.1} parent=23 // pred_check
        %p164 = pneg %p56
      $region30: #{vae_forward.1} parent=23 // pred_check_branch
        %166 = sbr.rel (%p164) target = $region32
      $region31: #{vae_forward.1} parent=23 // pred_region
        %s167 = smul.u32 3, %s10
        %p168 = scmp.lt.s32.totalorder %s167, 5
        %s169 = scalar_select %p168, %s167, 5
        %s170 = smul.addr %s169, 8
        %s171 = scalar_lea.vmem %s1, %s170
        %s172 = smul.u32 3, %s10
      $region32: #{vae_forward.1} parent=23 // pred_fallthru
        _
    $region24: #{vae_forward.1} parent=5 // pred_fallthru
      _
    %p173 = scmp.le.s32.totalorder 1, %s10
    %p174 = scmp.lt.s32.totalorder %s10, 3
    %p175 = pnand %p173, %p174
    %p176 = pneg %p175
    // Predicated region
    $region33: #{vae_forward.1} parent=5 // pred_check
      _
    $region34: #{vae_forward.1} parent=5 // pred_check_branch
      %178 = sbr.rel (%p175) target = $region36
    $region35: #{vae_forward.1} parent=5 // pred_region
      %s179 = ssub.s32 %s10, 1
      %s180 = smul.u32 3, %s15
      %p181 = scmp.lt.s32.totalorder %s180, 5
      %s182 = scalar_select %p181, %s180, 5
      %s183 = smul.addr %s182, 8
      %s184 = scalar_lea.vmem %s0, %s183
      %p185 = pneg %p36
      %p186 = pneg %p33
      %s187 = smul.u32 3, %s15
      %p188 = scmp.lt.s32.totalorder %s187, 5
      %s189 = scalar_select %p188, %s187, 5
      %s190 = smul.addr %s189, 8
      %s191 = scalar_lea.vmem %s1, %s190
      %p192 = pneg %p62
      %p193 = pneg %p59
      %p194 = pneg %p83
      %p195 = pneg %p80
      %p196 = pneg %p104
      %p197 = pneg %p101
      %p198 = pneg %p130
      %p199 = pneg %p127
      %s200 = smul.u32 3, %s15
      %p201 = scmp.lt.s32.totalorder %s200, 5
      %s202 = scalar_select %p201, %s200, 5
      %s203 = smul.addr %s202, 8
      %s204 = scalar_lea.vmem %s4, %s203
      %s205 = smul.u32 3, %s15
      %p206 = scmp.lt.s32.totalorder %s205, 5
      %s207 = scalar_select %p206, %s205, 5
      %s208 = smul.addr %s207, 8
      %s209 = scalar_lea.vmem %s0, %s208
      %s210 = smul.u32 3, %s15
      %s211 = smul.u32 3, %s15
      %p212 = scmp.lt.s32.totalorder %s211, 5
      %s213 = scalar_select %p212, %s211, 5
      %s214 = smul.addr %s213, 8
      %s215 = scalar_lea.vmem %s1, %s214
      %s216 = smul.u32 3, %s15
      %s217 = smul.u32 3, %s15
      %p218 = scmp.lt.s32.totalorder %s217, 5
      %s219 = scalar_select %p218, %s217, 5
      %s220 = smul.addr %s219, 8
      %s221 = scalar_lea.vmem %s4, %s220
      %s222 = smul.u32 3, %s15
      %v223 = vld [vmem:[%s209] sm:$0xff]
      %v224 = vld [vmem:[%s209 + $0x8] sm:$0xff]
      %v225 = vld [vmem:[%s209 + $0x10] sm:$0xff]
      %v226 = vld [vmem:[%s215] sm:$0xff]
      %v227 = vld [vmem:[%s215 + $0x8] sm:$0xff]
      %v228 = vld [vmem:[%s215 + $0x10] sm:$0xff]
      %v229 = vld [vmem:[%s2] sm:$0xff]
      %v230 = vld [vmem:[%s2 + $0x18] sm:$0xff]
      %v231 = vld [vmem:[%s2 + $0x30] sm:$0xff]
      %v232 = vld [vmem:[%s2 + $0x48] sm:$0xff]
      %v233 = vld [vmem:[%s2 + $0x7f] ss:$0 sm:$0xff]
      %v234 = vld [vmem:[%s2 + $0x8] sm:$0xff]
      %v235 = vld [vmem:[%s2 + $0x20] sm:$0xff]
      %v236 = vld [vmem:[%s2 + $0x38] sm:$0xff]
      %v237 = vld [vmem:[%s2 + $0x50] sm:$0xff]
      %v238 = vld [vmem:[%s2 + $0x87] ss:$0 sm:$0xff]
      %v239 = vld [vmem:[%s2 + $0x10] sm:$0xff]
      %v240 = vld [vmem:[%s2 + $0x28] sm:$0xff]
      %v241 = vld [vmem:[%s2 + $0x40] sm:$0xff]
      %v242 = vld [vmem:[%s2 + $0x58] sm:$0xff]
      %v243 = vld [vmem:[%s2 + $0x8f] ss:$0 sm:$0xff]
      %vm244 = vcmask 261120
      %v246 = vsel %vm244, %v223, 0
      %v249 = vsel %vm244, %v224, 0
      %v252 = vsel %vm244, %v225, 0
      %254 = vmatprep.subr.mxu0 0.0
      %255 = vmatpush1.msra.mxu0 %v229
      %256 = vmatprep.subr.mxu0 0.0
      %257 = vmatpush1.msra.mxu0 %v230
      %258 = vmatprep.subr.mxu0 0.0
      %259 = vmatpush1.msra.mxu0 %v231
      %260 = vmatprep.subr.mxu0 0.0
      %261 = vmatpush1.msra.mxu0 %v232
      %262 = vmatprep.subr.mxu0 0.0
      %263 = vmatpush1.msra.mxu0 0.0
      %264 = vmatprep.subr.mxu0 0.0
      %265 = vmatpush1.msra.mxu0 0.0
      %266 = vmatprep.subr.mxu0 0.0
      %267 = vmatpush1.msra.mxu0 0.0
      %268 = vmatprep.subr.mxu0 0.0
      %269 = vmatpush1.msra.mxu0 0.0
      %270 = vmatprep.subr.mxu0 0.0
      %271 = vmatpush1.msra.mxu0 0.0
      %272 = vmatprep.subr.mxu0 0.0
      %273 = vmatpush1.msra.mxu0 0.0
      %274 = vmatprep.subr.mxu0 0.0
      %275 = vmatpush1.msra.mxu0 0.0
      %276 = vmatprep.subr.mxu0 0.0
      %277 = vmatpush1.msra.mxu0 0.0
      %278 = vmatprep.subr.mxu0 0.0
      %279 = vmatpush1.msra.mxu0 0.0
      %280 = vmatprep.subr.mxu0 0.0
      %281 = vmatpush1.msra.mxu0 0.0
      %282 = vmatprep.subr.mxu0 0.0
      %283 = vmatpush1.msra.mxu0 0.0
      %284 = vmatprep.subr.mxu0 0.0
      %285 = vmatpush1.msra.mxu0 0.0
      %286 = vmatprep.subr.mxu0 0.0
      %287 = vmatpush1.msra.mxu0 0.0
      %288 = vmatprep.subr.mxu0 0.0
      %289 = vmatpush1.msra.mxu0 0.0
      %290 = vmatprep.subr.mxu0 0.0
      %291 = vmatpush1.msra.mxu0 0.0
      %292 = vmatprep.subr.mxu0 0.0
      %293 = vmatpush1.msra.mxu0 0.0
      %294 = vmatprep.subr.mxu0 0.0
      %295 = vmatpush1.msra.mxu0 0.0
      %296 = vmatprep.subr.mxu0 0.0
      %297 = vmatpush1.msra.mxu0 0.0
      %298 = vmatprep.subr.mxu0 0.0
      %299 = vmatpush1.msra.mxu0 0.0
      %300 = vmatprep.subr.mxu0 0.0
      %301 = vmatpush1.msra.mxu0 0.0
      %302 = vmatprep.subr.mxu0 0.0
      %303 = vmatpush1.msra.mxu0 0.0
      %304 = vmatprep.subr.mxu0 0.0
      %305 = vmatpush1.msra.mxu0 0.0
      %306 = vmatprep.subr.mxu0 0.0
      %307 = vmatpush1.msra.mxu0 0.0
      %308 = vmatprep.subr.mxu0 0.0
      %309 = vmatpush1.msra.mxu0 0.0
      %310 = vmatprep.subr.mxu0 0.0
      %311 = vmatpush1.msra.mxu0 0.0
      %312 = vmatprep.subr.mxu0 0.0
      %313 = vmatpush1.msra.mxu0 0.0
      %314 = vmatprep.subr.mxu0 0.0
      %315 = vmatpush1.msra.mxu0 0.0
      %316 = vmatprep.subr.mxu0 0.0
      %317 = vmatpush1.msra.mxu0 0.0
      %318 = vmatprep.mubr.f32.mxu0 0.0
      %319 = vmatmul.mubr.f32.gmra.mrb[0].mxu0 %v246
      %v320 = vpop.f32.mrb[0].mxu0
      %v321 = vadd.f32 %v233, %v320
      %v322 = vpop.f32.mrb[0].mxu0
      %323 = vmatprep.mubr.f32.mxu0 0.0
      %324 = vmatmul.mubr.f32.gmra.mrb[0].mxu0 %v249
      %v325 = vpop.f32.mrb[0].mxu0
      %v326 = vadd.f32 %v233, %v325
      %v327 = vpop.f32.mrb[0].mxu0
      %328 = vmatprep.mubr.f32.mxu0 0.0
      %329 = vmatmul.mubr.f32.gmra.mrb[0].mxu0 %v252
      %v330 = vpop.f32.mrb[0].mxu0
      %v331 = vadd.f32 %v233, %v330
      %v332 = vpop.f32.mrb[0].mxu0
      %333 = vdwg.mxu0
      %v334 = vmax.f32 %v321, 0.0
      %v335 = vmax.f32 %v326, 0.0
      %v336 = vmax.f32 %v331, 0.0
      %v338 = vsel %vm244, %v334, 0
      %v341 = vsel %vm244, %v335, 0
      %v344 = vsel %vm244, %v336, 0
      %346 = vmatprep.subr.mxu0 0.0
      %347 = vmatpush1.msra.mxu0 %v234
      %348 = vmatprep.subr.mxu0 0.0
      %349 = vmatpush1.msra.mxu0 %v235
      %350 = vmatprep.subr.mxu0 0.0
      %351 = vmatpush1.msra.mxu0 %v236
      %352 = vmatprep.subr.mxu0 0.0
      %353 = vmatpush1.msra.mxu0 %v237
      %354 = vmatprep.subr.mxu0 0.0
      %355 = vmatpush1.msra.mxu0 0.0
      %356 = vmatprep.subr.mxu0 0.0
      %357 = vmatpush1.msra.mxu0 0.0
      %358 = vmatprep.subr.mxu0 0.0
      %359 = vmatpush1.msra.mxu0 0.0
      %360 = vmatprep.subr.mxu0 0.0
      %361 = vmatpush1.msra.mxu0 0.0
      %362 = vmatprep.subr.mxu0 0.0
      %363 = vmatpush1.msra.mxu0 0.0
      %364 = vmatprep.subr.mxu0 0.0
      %365 = vmatpush1.msra.mxu0 0.0
      %366 = vmatprep.subr.mxu0 0.0
      %367 = vmatpush1.msra.mxu0 0.0
      %368 = vmatprep.subr.mxu0 0.0
      %369 = vmatpush1.msra.mxu0 0.0
      %370 = vmatprep.subr.mxu0 0.0
      %371 = vmatpush1.msra.mxu0 0.0
      %372 = vmatprep.subr.mxu0 0.0
      %373 = vmatpush1.msra.mxu0 0.0
      %374 = vmatprep.subr.mxu0 0.0
      %375 = vmatpush1.msra.mxu0 0.0
      %376 = vmatprep.subr.mxu0 0.0
      %377 = vmatpush1.msra.mxu0 0.0
      %378 = vmatprep.subr.mxu0 0.0
      %379 = vmatpush1.msra.mxu0 0.0
      %380 = vmatprep.subr.mxu0 0.0
      %381 = vmatpush1.msra.mxu0 0.0
      %382 = vmatprep.subr.mxu0 0.0
      %383 = vmatpush1.msra.mxu0 0.0
      %384 = vmatprep.subr.mxu0 0.0
      %385 = vmatpush1.msra.mxu0 0.0
      %386 = vmatprep.subr.mxu0 0.0
      %387 = vmatpush1.msra.mxu0 0.0
      %388 = vmatprep.subr.mxu0 0.0
      %389 = vmatpush1.msra.mxu0 0.0
      %390 = vmatprep.subr.mxu0 0.0
      %391 = vmatpush1.msra.mxu0 0.0
      %392 = vmatprep.subr.mxu0 0.0
      %393 = vmatpush1.msra.mxu0 0.0
      %394 = vmatprep.subr.mxu0 0.0
      %395 = vmatpush1.msra.mxu0 0.0
      %396 = vmatprep.subr.mxu0 0.0
      %397 = vmatpush1.msra.mxu0 0.0
      %398 = vmatprep.subr.mxu0 0.0
      %399 = vmatpush1.msra.mxu0 0.0
      %400 = vmatprep.subr.mxu0 0.0
      %401 = vmatpush1.msra.mxu0 0.0
      %402 = vmatprep.subr.mxu0 0.0
      %403 = vmatpush1.msra.mxu0 0.0
      %404 = vmatprep.subr.mxu0 0.0
      %405 = vmatpush1.msra.mxu0 0.0
      %406 = vmatprep.subr.mxu0 0.0
      %407 = vmatpush1.msra.mxu0 0.0
      %408 = vmatprep.subr.mxu0 0.0
      %409 = vmatpush1.msra.mxu0 0.0
      %410 = vmatprep.mubr.f32.mxu0 0.0
      %411 = vmatmul.mubr.f32.gmra.mrb[0].mxu0 %v338
      %v412 = vpop.f32.mrb[0].mxu0
      %v413 = vadd.f32 %v238, %v412
      %v414 = vpop.f32.mrb[0].mxu0
      %415 = vmatprep.mubr.f32.mxu0 0.0
      %416 = vmatmul.mubr.f32.gmra.mrb[0].mxu0 %v341
      %v417 = vpop.f32.mrb[0].mxu0
      %v418 = vadd.f32 %v238, %v417
      %v419 = vpop.f32.mrb[0].mxu0
      %420 = vmatprep.mubr.f32.mxu0 0.0
      %421 = vmatmul.mubr.f32.gmra.mrb[0].mxu0 %v344
      %v422 = vpop.f32.mrb[0].mxu0
      %v423 = vadd.f32 %v238, %v422
      %v424 = vpop.f32.mrb[0].mxu0
      %425 = vdwg.mxu0
      %v426 = vmax.f32 %v413, 0.0
      %v427 = vmax.f32 %v418, 0.0
      %v428 = vmax.f32 %v423, 0.0
      %v430 = vsel %vm244, %v426, 0
      %v433 = vsel %vm244, %v427, 0
      %v436 = vsel %vm244, %v428, 0
      %438 = vmatprep.subr.mxu0 0.0
      %439 = vmatpush1.msra.mxu0 %v239
      %440 = vmatprep.subr.mxu0 0.0
      %441 = vmatpush1.msra.mxu0 %v240
      %442 = vmatprep.subr.mxu0 0.0
      %443 = vmatpush1.msra.mxu0 %v241
      %444 = vmatprep.subr.mxu0 0.0
      %445 = vmatpush1.msra.mxu0 %v242
      %446 = vmatprep.subr.mxu0 0.0
      %447 = vmatpush1.msra.mxu0 0.0
      %448 = vmatprep.subr.mxu0 0.0
      %449 = vmatpush1.msra.mxu0 0.0
      %450 = vmatprep.subr.mxu0 0.0
      %451 = vmatpush1.msra.mxu0 0.0
      %452 = vmatprep.subr.mxu0 0.0
      %453 = vmatpush1.msra.mxu0 0.0
      %454 = vmatprep.subr.mxu0 0.0
      %455 = vmatpush1.msra.mxu0 0.0
      %456 = vmatprep.subr.mxu0 0.0
      %457 = vmatpush1.msra.mxu0 0.0
      %458 = vmatprep.subr.mxu0 0.0
      %459 = vmatpush1.msra.mxu0 0.0
      %460 = vmatprep.subr.mxu0 0.0
      %461 = vmatpush1.msra.mxu0 0.0
      %462 = vmatprep.subr.mxu0 0.0
      %463 = vmatpush1.msra.mxu0 0.0
      %464 = vmatprep.subr.mxu0 0.0
      %465 = vmatpush1.msra.mxu0 0.0
      %466 = vmatprep.subr.mxu0 0.0
      %467 = vmatpush1.msra.mxu0 0.0
      %468 = vmatprep.subr.mxu0 0.0
      %469 = vmatpush1.msra.mxu0 0.0
      %470 = vmatprep.subr.mxu0 0.0
      %471 = vmatpush1.msra.mxu0 0.0
      %472 = vmatprep.subr.mxu0 0.0
      %473 = vmatpush1.msra.mxu0 0.0
      %474 = vmatprep.subr.mxu0 0.0
      %475 = vmatpush1.msra.mxu0 0.0
      %476 = vmatprep.subr.mxu0 0.0
      %477 = vmatpush1.msra.mxu0 0.0
      %478 = vmatprep.subr.mxu0 0.0
      %479 = vmatpush1.msra.mxu0 0.0
      %480 = vmatprep.subr.mxu0 0.0
      %481 = vmatpush1.msra.mxu0 0.0
      %482 = vmatprep.subr.mxu0 0.0
      %483 = vmatpush1.msra.mxu0 0.0
      %484 = vmatprep.subr.mxu0 0.0
      %485 = vmatpush1.msra.mxu0 0.0
      %486 = vmatprep.subr.mxu0 0.0
      %487 = vmatpush1.msra.mxu0 0.0
      %488 = vmatprep.subr.mxu0 0.0
      %489 = vmatpush1.msra.mxu0 0.0
      %490 = vmatprep.subr.mxu0 0.0
      %491 = vmatpush1.msra.mxu0 0.0
      %492 = vmatprep.subr.mxu0 0.0
      %493 = vmatpush1.msra.mxu0 0.0
      %494 = vmatprep.subr.mxu0 0.0
      %495 = vmatpush1.msra.mxu0 0.0
      %496 = vmatprep.subr.mxu0 0.0
      %497 = vmatpush1.msra.mxu0 0.0
      %498 = vmatprep.subr.mxu0 0.0
      %499 = vmatpush1.msra.mxu0 0.0
      %500 = vmatprep.subr.mxu0 0.0
      %501 = vmatpush1.msra.mxu0 0.0
      %502 = vmatprep.mubr.f32.mxu0 0.0
      %503 = vmatmul.mubr.f32.gmra.mrb[0].mxu0 %v430
      %v504 = vpop.f32.mrb[0].mxu0
      %v505 = vadd.f32 %v243, %v504
      %v506 = vpop.f32.mrb[0].mxu0
      %507 = vmatprep.mubr.f32.mxu0 0.0
      %508 = vmatmul.mubr.f32.gmra.mrb[0].mxu0 %v433
      %v509 = vpop.f32.mrb[0].mxu0
      %v510 = vadd.f32 %v243, %v509
      %v511 = vpop.f32.mrb[0].mxu0
      %512 = vmatprep.mubr.f32.mxu0 0.0
      %513 = vmatmul.mubr.f32.gmra.mrb[0].mxu0 %v436
      %v514 = vpop.f32.mrb[0].mxu0
      %v515 = vadd.f32 %v243, %v514
      %v516 = vpop.f32.mrb[0].mxu0
      %517 = vdwg.mxu0
      %v518 = vmul.f32 %v505, 0.5
      %v519 = vmul.f32 %v510, 0.5
      %v520 = vmul.f32 %v515, 0.5
      %v521 = vmul.f32 %v518, 1.442695
      %v522 = vpow.pop %v521
      %v523 = vmul.f32 %v519, 1.442695
      %v524 = vpow.pop %v523
      %v525 = vmul.f32 %v520, 1.442695
      %v526 = vpow.pop %v525
      %530 = vrot.lane.b32.xlu0 %v226, 8
      %v531 = vpop.permute.xlu0 %530
      %532 = vrot.lane.b32.xlu0 %v227, 8
      %v533 = vpop.permute.xlu0 %532
      %534 = vrot.lane.b32.xlu0 %v228, 8
      %v535 = vpop.permute.xlu0 %534
      %v539 = vmul.f32 %v522, %v531
      %v540 = vmul.f32 %v524, %v533
      %v541 = vmul.f32 %v526, %v535
      %545 = vrot.lane.b32.xlu0 %v539, 120
      %v546 = vpop.permute.xlu0 %545
      %547 = vrot.lane.b32.xlu0 %v540, 120
      %v548 = vpop.permute.xlu0 %547
      %549 = vrot.lane.b32.xlu0 %v541, 120
      %v550 = vpop.permute.xlu0 %549
      %v554 = vadd.f32 %v505, %v546
      %v555 = vadd.f32 %v510, %v548
      %v556 = vadd.f32 %v515, %v550
      %v557 = vld [vmem:[%s3] sm:$0xff]
      %v558 = vld [vmem:[%s3 + $0x7f] ss:$0 sm:$0xff]
      %v559 = vld [vmem:[%s3 + $0x8] sm:$0xff]
      %v560 = vld [vmem:[%s3 + $0x20] sm:$0xff]
      %v561 = vld [vmem:[%s3 + $0x38] sm:$0xff]
      %v562 = vld [vmem:[%s3 + $0x50] sm:$0xff]
      %v563 = vld [vmem:[%s3 + $0x87] ss:$0 sm:$0xff]
      %v564 = vld [vmem:[%s3 + $0x10] sm:$0xff]
      %v565 = vld [vmem:[%s3 + $0x28] sm:$0xff]
      %v566 = vld [vmem:[%s3 + $0x40] sm:$0xff]
      %v567 = vld [vmem:[%s3 + $0x58] sm:$0xff]
      %v568 = vld [vmem:[%s3 + $0x8f] ss:$0 sm:$0xff]
      %vm569 = vcmask 64512
      %v571 = vsel %vm569, %v554, 0
      %v574 = vsel %vm569, %v555, 0
      %v577 = vsel %vm569, %v556, 0
      %579 = vmatprep.subr.mxu0 0.0
      %580 = vmatpush1.msra.mxu0 %v557
      %581 = vmatprep.subr.mxu0 0.0
      %582 = vmatpush1.msra.mxu0 0.0
      %583 = vmatprep.subr.mxu0 0.0
      %584 = vmatpush1.msra.mxu0 0.0
      %585 = vmatprep.subr.mxu0 0.0
      %586 = vmatpush1.msra.mxu0 0.0
      %587 = vmatprep.subr.mxu0 0.0
      %588 = vmatpush1.msra.mxu0 0.0
      %589 = vmatprep.subr.mxu0 0.0
      %590 = vmatpush1.msra.mxu0 0.0
      %591 = vmatprep.subr.mxu0 0.0
      %592 = vmatpush1.msra.mxu0 0.0
      %593 = vmatprep.subr.mxu0 0.0
      %594 = vmatpush1.msra.mxu0 0.0
      %595 = vmatprep.subr.mxu0 0.0
      %596 = vmatpush1.msra.mxu0 0.0
      %597 = vmatprep.subr.mxu0 0.0
      %598 = vmatpush1.msra.mxu0 0.0
      %599 = vmatprep.subr.mxu0 0.0
      %600 = vmatpush1.msra.mxu0 0.0
      %601 = vmatprep.subr.mxu0 0.0
      %602 = vmatpush1.msra.mxu0 0.0
      %603 = vmatprep.subr.mxu0 0.0
      %604 = vmatpush1.msra.mxu0 0.0
      %605 = vmatprep.subr.mxu0 0.0
      %606 = vmatpush1.msra.mxu0 0.0
      %607 = vmatprep.subr.mxu0 0.0
      %608 = vmatpush1.msra.mxu0 0.0
      %609 = vmatprep.subr.mxu0 0.0
      %610 = vmatpush1.msra.mxu0 0.0
      %611 = vmatprep.subr.mxu0 0.0
      %612 = vmatpush1.msra.mxu0 0.0
      %613 = vmatprep.subr.mxu0 0.0
      %614 = vmatpush1.msra.mxu0 0.0
      %615 = vmatprep.subr.mxu0 0.0
      %616 = vmatpush1.msra.mxu0 0.0
      %617 = vmatprep.subr.mxu0 0.0
      %618 = vmatpush1.msra.mxu0 0.0
      %619 = vmatprep.subr.mxu0 0.0
      %620 = vmatpush1.msra.mxu0 0.0
      %621 = vmatprep.subr.mxu0 0.0
      %622 = vmatpush1.msra.mxu0 0.0
      %623 = vmatprep.subr.mxu0 0.0
      %624 = vmatpush1.msra.mxu0 0.0
      %625 = vmatprep.subr.mxu0 0.0
      %626 = vmatpush1.msra.mxu0 0.0
      %627 = vmatprep.subr.mxu0 0.0
      %628 = vmatpush1.msra.mxu0 0.0
      %629 = vmatprep.subr.mxu0 0.0
      %630 = vmatpush1.msra.mxu0 0.0
      %631 = vmatprep.subr.mxu0 0.0
      %632 = vmatpush1.msra.mxu0 0.0
      %633 = vmatprep.subr.mxu0 0.0
      %634 = vmatpush1.msra.mxu0 0.0
      %635 = vmatprep.subr.mxu0 0.0
      %636 = vmatpush1.msra.mxu0 0.0
      %637 = vmatprep.subr.mxu0 0.0
      %638 = vmatpush1.msra.mxu0 0.0
      %639 = vmatprep.subr.mxu0 0.0
      %640 = vmatpush1.msra.mxu0 0.0
      %641 = vmatprep.subr.mxu0 0.0
      %642 = vmatpush1.msra.mxu0 0.0
      %643 = vmatprep.mubr.f32.mxu0 0.0
      %644 = vmatmul.mubr.f32.gmra.mrb[0].mxu0 %v571
      %v645 = vpop.f32.mrb[0].mxu0
      %v646 = vadd.f32 %v558, %v645
      %v647 = vpop.f32.mrb[0].mxu0
      %648 = vmatprep.mubr.f32.mxu0 0.0
      %649 = vmatmul.mubr.f32.gmra.mrb[0].mxu0 %v574
      %v650 = vpop.f32.mrb[0].mxu0
      %v651 = vadd.f32 %v558, %v650
      %v652 = vpop.f32.mrb[0].mxu0
      %653 = vmatprep.mubr.f32.mxu0 0.0
      %654 = vmatmul.mubr.f32.gmra.mrb[0].mxu0 %v577
      %v655 = vpop.f32.mrb[0].mxu0
      %v656 = vadd.f32 %v558, %v655
      %v657 = vpop.f32.mrb[0].mxu0
      %658 = vdwg.mxu0
      %v659 = vmax.f32 %v646, 0.0
      %v660 = vmax.f32 %v651, 0.0
      %v661 = vmax.f32 %v656, 0.0
      %v663 = vsel %vm244, %v659, 0
      %v666 = vsel %vm244, %v660, 0
      %v669 = vsel %vm244, %v661, 0
      %671 = vmatprep.subr.mxu0 0.0
      %672 = vmatpush1.msra.mxu0 %v559
      %673 = vmatprep.subr.mxu0 0.0
      %674 = vmatpush1.msra.mxu0 %v560
      %675 = vmatprep.subr.mxu0 0.0
      %676 = vmatpush1.msra.mxu0 %v561
      %677 = vmatprep.subr.mxu0 0.0
      %678 = vmatpush1.msra.mxu0 %v562
      %679 = vmatprep.subr.mxu0 0.0
      %680 = vmatpush1.msra.mxu0 0.0
      %681 = vmatprep.subr.mxu0 0.0
      %682 = vmatpush1.msra.mxu0 0.0
      %683 = vmatprep.subr.mxu0 0.0
      %684 = vmatpush1.msra.mxu0 0.0
      %685 = vmatprep.subr.mxu0 0.0
      %686 = vmatpush1.msra.mxu0 0.0
      %687 = vmatprep.subr.mxu0 0.0
      %688 = vmatpush1.msra.mxu0 0.0
      %689 = vmatprep.subr.mxu0 0.0
      %690 = vmatpush1.msra.mxu0 0.0
      %691 = vmatprep.subr.mxu0 0.0
      %692 = vmatpush1.msra.mxu0 0.0
      %693 = vmatprep.subr.mxu0 0.0
      %694 = vmatpush1.msra.mxu0 0.0
      %695 = vmatprep.subr.mxu0 0.0
      %696 = vmatpush1.msra.mxu0 0.0
      %697 = vmatprep.subr.mxu0 0.0
      %698 = vmatpush1.msra.mxu0 0.0
      %699 = vmatprep.subr.mxu0 0.0
      %700 = vmatpush1.msra.mxu0 0.0
      %701 = vmatprep.subr.mxu0 0.0
      %702 = vmatpush1.msra.mxu0 0.0
      %703 = vmatprep.subr.mxu0 0.0
      %704 = vmatpush1.msra.mxu0 0.0
      %705 = vmatprep.subr.mxu0 0.0
      %706 = vmatpush1.msra.mxu0 0.0
      %707 = vmatprep.subr.mxu0 0.0
      %708 = vmatpush1.msra.mxu0 0.0
      %709 = vmatprep.subr.mxu0 0.0
      %710 = vmatpush1.msra.mxu0 0.0
      %711 = vmatprep.subr.mxu0 0.0
      %712 = vmatpush1.msra.mxu0 0.0
      %713 = vmatprep.subr.mxu0 0.0
      %714 = vmatpush1.msra.mxu0 0.0
      %715 = vmatprep.subr.mxu0 0.0
      %716 = vmatpush1.msra.mxu0 0.0
      %717 = vmatprep.subr.mxu0 0.0
      %718 = vmatpush1.msra.mxu0 0.0
      %719 = vmatprep.subr.mxu0 0.0
      %720 = vmatpush1.msra.mxu0 0.0
      %721 = vmatprep.subr.mxu0 0.0
      %722 = vmatpush1.msra.mxu0 0.0
      %723 = vmatprep.subr.mxu0 0.0
      %724 = vmatpush1.msra.mxu0 0.0
      %725 = vmatprep.subr.mxu0 0.0
      %726 = vmatpush1.msra.mxu0 0.0
      %727 = vmatprep.subr.mxu0 0.0
      %728 = vmatpush1.msra.mxu0 0.0
      %729 = vmatprep.subr.mxu0 0.0
      %730 = vmatpush1.msra.mxu0 0.0
      %731 = vmatprep.subr.mxu0 0.0
      %732 = vmatpush1.msra.mxu0 0.0
      %733 = vmatprep.subr.mxu0 0.0
      %734 = vmatpush1.msra.mxu0 0.0
      %735 = vmatprep.mubr.f32.mxu0 0.0
      %736 = vmatmul.mubr.f32.gmra.mrb[0].mxu0 %v663
      %v737 = vpop.f32.mrb[0].mxu0
      %v738 = vadd.f32 %v563, %v737
      %v739 = vpop.f32.mrb[0].mxu0
      %740 = vmatprep.mubr.f32.mxu0 0.0
      %741 = vmatmul.mubr.f32.gmra.mrb[0].mxu0 %v666
      %v742 = vpop.f32.mrb[0].mxu0
      %v743 = vadd.f32 %v563, %v742
      %v744 = vpop.f32.mrb[0].mxu0
      %745 = vmatprep.mubr.f32.mxu0 0.0
      %746 = vmatmul.mubr.f32.gmra.mrb[0].mxu0 %v669
      %v747 = vpop.f32.mrb[0].mxu0
      %v748 = vadd.f32 %v563, %v747
      %v749 = vpop.f32.mrb[0].mxu0
      %750 = vdwg.mxu0
      %v751 = vmax.f32 %v738, 0.0
      %v752 = vmax.f32 %v743, 0.0
      %v753 = vmax.f32 %v748, 0.0
      %v755 = vsel %vm244, %v751, 0
      %v758 = vsel %vm244, %v752, 0
      %v761 = vsel %vm244, %v753, 0
      %763 = vmatprep.subr.mxu0 0.0
      %764 = vmatpush1.msra.mxu0 %v564
      %765 = vmatprep.subr.mxu0 0.0
      %766 = vmatpush1.msra.mxu0 %v565
      %767 = vmatprep.subr.mxu0 0.0
      %768 = vmatpush1.msra.mxu0 %v566
      %769 = vmatprep.subr.mxu0 0.0
      %770 = vmatpush1.msra.mxu0 %v567
      %771 = vmatprep.subr.mxu0 0.0
      %772 = vmatpush1.msra.mxu0 0.0
      %773 = vmatprep.subr.mxu0 0.0
      %774 = vmatpush1.msra.mxu0 0.0
      %775 = vmatprep.subr.mxu0 0.0
      %776 = vmatpush1.msra.mxu0 0.0
      %777 = vmatprep.subr.mxu0 0.0
      %778 = vmatpush1.msra.mxu0 0.0
      %779 = vmatprep.subr.mxu0 0.0
      %780 = vmatpush1.msra.mxu0 0.0
      %781 = vmatprep.subr.mxu0 0.0
      %782 = vmatpush1.msra.mxu0 0.0
      %783 = vmatprep.subr.mxu0 0.0
      %784 = vmatpush1.msra.mxu0 0.0
      %785 = vmatprep.subr.mxu0 0.0
      %786 = vmatpush1.msra.mxu0 0.0
      %787 = vmatprep.subr.mxu0 0.0
      %788 = vmatpush1.msra.mxu0 0.0
      %789 = vmatprep.subr.mxu0 0.0
      %790 = vmatpush1.msra.mxu0 0.0
      %791 = vmatprep.subr.mxu0 0.0
      %792 = vmatpush1.msra.mxu0 0.0
      %793 = vmatprep.subr.mxu0 0.0
      %794 = vmatpush1.msra.mxu0 0.0
      %795 = vmatprep.subr.mxu0 0.0
      %796 = vmatpush1.msra.mxu0 0.0
      %797 = vmatprep.subr.mxu0 0.0
      %798 = vmatpush1.msra.mxu0 0.0
      %799 = vmatprep.subr.mxu0 0.0
      %800 = vmatpush1.msra.mxu0 0.0
      %801 = vmatprep.subr.mxu0 0.0
      %802 = vmatpush1.msra.mxu0 0.0
      %803 = vmatprep.subr.mxu0 0.0
      %804 = vmatpush1.msra.mxu0 0.0
      %805 = vmatprep.subr.mxu0 0.0
      %806 = vmatpush1.msra.mxu0 0.0
      %807 = vmatprep.subr.mxu0 0.0
      %808 = vmatpush1.msra.mxu0 0.0
      %809 = vmatprep.subr.mxu0 0.0
      %810 = vmatpush1.msra.mxu0 0.0
      %811 = vmatprep.subr.mxu0 0.0
      %812 = vmatpush1.msra.mxu0 0.0
      %813 = vmatprep.subr.mxu0 0.0
      %814 = vmatpush1.msra.mxu0 0.0
      %815 = vmatprep.subr.mxu0 0.0
      %816 = vmatpush1.msra.mxu0 0.0
      %817 = vmatprep.subr.mxu0 0.0
      %818 = vmatpush1.msra.mxu0 0.0
      %819 = vmatprep.subr.mxu0 0.0
      %820 = vmatpush1.msra.mxu0 0.0
      %821 = vmatprep.subr.mxu0 0.0
      %822 = vmatpush1.msra.mxu0 0.0
      %823 = vmatprep.subr.mxu0 0.0
      %824 = vmatpush1.msra.mxu0 0.0
      %825 = vmatprep.subr.mxu0 0.0
      %826 = vmatpush1.msra.mxu0 0.0
      %827 = vmatprep.mubr.f32.mxu0 0.0
      %828 = vmatmul.mubr.f32.gmra.mrb[0].mxu0 %v755
      %v829 = vpop.f32.mrb[0].mxu0
      %v830 = vadd.f32 %v568, %v829
      %v831 = vpop.f32.mrb[0].mxu0
      %832 = vmatprep.mubr.f32.mxu0 0.0
      %833 = vmatmul.mubr.f32.gmra.mrb[0].mxu0 %v758
      %v834 = vpop.f32.mrb[0].mxu0
      %v835 = vadd.f32 %v568, %v834
      %v836 = vpop.f32.mrb[0].mxu0
      %837 = vmatprep.mubr.f32.mxu0 0.0
      %838 = vmatmul.mubr.f32.gmra.mrb[0].mxu0 %v761
      %v839 = vpop.f32.mrb[0].mxu0
      %v840 = vadd.f32 %v568, %v839
      %v841 = vpop.f32.mrb[0].mxu0
      %842 = vdwg.mxu0
      %843 = vrot.lane.b32.xlu0 %v554, 64
      %v844 = vpop.permute.xlu0 %843
      %845 = vrot.lane.b32.xlu0 %v555, 64
      %v846 = vpop.permute.xlu0 %845
      %847 = vrot.lane.b32.xlu0 %v556, 64
      %v848 = vpop.permute.xlu0 %847
      %855 = vrot.lane.b32.xlu0 %v505, 72
      %v856 = vpop.permute.xlu0 %855
      %857 = vrot.lane.b32.xlu0 %v510, 72
      %v858 = vpop.permute.xlu0 %857
      %859 = vrot.lane.b32.xlu0 %v515, 72
      %v860 = vpop.permute.xlu0 %859
      %vm864 = vcmask 523264
      %v865 = vsel %vm864, %v830, %v844
      %v866 = vsel %vm864, %v835, %v846
      %v867 = vsel %vm864, %v840, %v848
      %vm868 = vcmask 588800
      %v869 = vsel %vm868, %v865, %v856
      %v870 = vsel %vm868, %v866, %v858
      %v871 = vsel %vm868, %v867, %v860
      %vm872 = vcmask 719872
      %v873 = vsel %vm872, %v869, 0.0
      %v874 = vsel %vm872, %v870, 0.0
      %v875 = vsel %vm872, %v871, 0.0
      %876 = vst [vmem:[%s221] sm:$0xff] %v873
      %877 = vst [vmem:[%s221 + $0x8] sm:$0xff] %v874
      %878 = vst [vmem:[%s221 + $0x10] sm:$0xff] %v875
      %s879 = smul.u32 3, %s15
      %p880 = scmp.lt.s32.totalorder %s879, 5
      %s881 = scalar_select %p880, %s879, 5
      %s882 = smul.addr %s881, 8
      %s883 = scalar_lea.vmem %s4, %s882
      // Predicated region
      $region37: #{vae_forward.1} parent=35 // pred_check
        %p884 = pneg %p127
      $region38: #{vae_forward.1} parent=35 // pred_check_branch
        %886 = sbr.rel (%p884) target = $region40
      $region39: #{vae_forward.1} parent=35 // pred_region
        %s887 = smul.u32 3, %s15
      $region40: #{vae_forward.1} parent=35 // pred_fallthru
        _
    $region36: #{vae_forward.1} parent=5 // pred_fallthru
      _
    %p888 = scmp.le.s32.totalorder 2, %s10
    // Predicated region
    $region41: #{vae_forward.1} parent=5 // pred_check
      %p889 = pneg %p888
    $region42: #{vae_forward.1} parent=5 // pred_check_branch
      %891 = sbr.rel (%p889) target = $region44
    $region43: #{vae_forward.1} parent=5 // pred_region
      %s892 = ssub.s32 %s10, 2
      // Predicated region
      $region45: #{vae_forward.1} parent=43 // pred_check
        %p893 = pneg %p133
      $region46: #{vae_forward.1} parent=43 // pred_check_branch
        %895 = sbr.rel (%p893) target = $region48
      $region47: #{vae_forward.1} parent=43 // pred_region
        %s896 = smul.u32 3, %s16
        %p897 = scmp.lt.s32.totalorder %s896, 5
        %s898 = scalar_select %p897, %s896, 5
        %s899 = smul.addr %s898, 8
        %s900 = scalar_lea.vmem %s4, %s899
      $region48: #{vae_forward.1} parent=43 // pred_fallthru
        _
    $region44: #{vae_forward.1} parent=5 // pred_fallthru
      _
  $region6: #{vae_forward.1} parent=0 // loop_footer
    %s14 = sadd.s32 1, %s10
  $region7: #{vae_forward.1} parent=0 // loop_footer_branch
    %9 = sbr.rel target = $region3
  $region8: #{vae_forward.1} parent=0 // loop_exit
    _

</llo_original>
